<compile_context>
chip_gen: v7x
topology: tpu7x:2x2x1
jax: 0.10.0
libtpu: 0.0.40
codegen_flags: <defaults>
</compile_context>

<pallas_src>
import jax
import jax.numpy as jnp
from jax.experimental import pallas as pl
from jax.experimental.pallas import tpu as pltpu

# "opt" hyperparameters (chosen small, consistent with the module's forward)
LATENT_DIM = 32
IMG_SIZE = 16
CHANNELS = 4
HIDDEN = 256
OUT_DIM = CHANNELS * IMG_SIZE * IMG_SIZE  # 1024

# Batch tile cap: 512 rows per step (multiple of 256 for v6e/v7x MXUs, of 128
# for v5e).  Double-buffered bf16 output at TB=512 is ~2 MiB; with resident
# bf16 weights (~0.5 MiB) and f32 x tiles this sits far under the 32 MiB
# scoped VMEM default on every generation, including v7x's 64 MiB part.
DEFAULT_TB = 512


def generator_kernel(x_ref, w1_ref, b1_ref, w2_ref, b2_ref, o_ref):
    # Cast activations to bf16 in-kernel (VPU); weights arrive already bf16.
    x = x_ref[...].astype(jnp.bfloat16)
    # First linear: bf16 MXU matmul, f32 accumulation.
    h = jnp.dot(x, w1_ref[...], preferred_element_type=jnp.float32)
    # Bias + ReLU in f32 (VPU).
    h = jnp.maximum(h + b1_ref[...], 0.0)
    # Second linear: cast hidden to bf16 for the MXU, accumulate in f32.
    y = jnp.dot(h.astype(jnp.bfloat16), w2_ref[...],
                preferred_element_type=jnp.float32)
    y = y + b2_ref[...]
    # Tanh in f32 (EUP slot; separate from MXU/VPU), store in output dtype.
    o_ref[...] = jnp.tanh(y).astype(o_ref.dtype)


def _round_up(n, m):
    return ((n + m - 1) // m) * m


def _choose_tb(B, tb_cap):
    """Batch tile: aligned to 16 rows, capped at tb_cap.  When the whole
    (padded) batch fits in one tile but is moderately large, split it in two
    so the parallel grid axis has >=2 steps (v7x has 2 TensorCores)."""
    b16 = _round_up(B, 16)
    if b16 <= tb_cap:
        if b16 >= 512 and (b16 // 2) % 16 == 0:
            return b16 // 2
        return b16
    return tb_cap


def generator_forward(x, w1, b1, w2, b2, *, tb=DEFAULT_TB,
                      out_dtype=jnp.bfloat16):
    """x: (B, latent_dim) float32 (Flatten on a 2-D input is the identity).
    w1/w2 are expected in bf16 (cast once at init); b1/b2 in f32.
    Returns (B, CHANNELS, IMG_SIZE, IMG_SIZE) in out_dtype."""
    B = x.shape[0]
    x = x.reshape((B, -1)).astype(jnp.float32)  # Flatten; x stays f32 on HBM

    # Weights should already be bf16; only cast if a caller passed f32.
    if w1.dtype != jnp.bfloat16:
        w1 = w1.astype(jnp.bfloat16)
    if w2.dtype != jnp.bfloat16:
        w2 = w2.astype(jnp.bfloat16)

    TB = _choose_tb(B, tb)
    B_pad = _round_up(B, TB)
    padded = B_pad != B
    if padded:
        x = jnp.pad(x, ((0, B_pad - B), (0, 0)))

    out_bytes = jnp.dtype(out_dtype).itemsize
    cost = pl.CostEstimate(
        flops=2 * B_pad * (LATENT_DIM * HIDDEN + HIDDEN * OUT_DIM),
        transcendentals=B_pad * OUT_DIM,
        bytes_accessed=(B_pad * LATENT_DIM * 4          # x (f32)
                        + w1.size * 2 + w2.size * 2     # weights (bf16)
                        + b1.size * 4 + b2.size * 4     # biases (f32)
                        + B_pad * OUT_DIM * out_bytes), # output
    )

    out_flat = pl.pallas_call(
        generator_kernel,
        out_shape=jax.ShapeDtypeStruct((B_pad, OUT_DIM), out_dtype),
        grid=(B_pad // TB,),
        in_specs=[
            # Activations: tiled along the batch axis (f32; cast in-kernel).
            pl.BlockSpec((TB, LATENT_DIM), lambda i: (i, 0)),
            # Weights / biases: constant block index -> stay resident in VMEM
            # (Pallas skips the re-DMA when the block index is unchanged).
            pl.BlockSpec((LATENT_DIM, HIDDEN), lambda i: (0, 0)),
            pl.BlockSpec((1, HIDDEN), lambda i: (0, 0)),
            pl.BlockSpec((HIDDEN, OUT_DIM), lambda i: (0, 0)),
            pl.BlockSpec((1, OUT_DIM), lambda i: (0, 0)),
        ],
        out_specs=pl.BlockSpec((TB, OUT_DIM), lambda i: (i, 0)),
        compiler_params=pltpu.CompilerParams(
            dimension_semantics=("parallel",),
        ),
        cost_estimate=cost,
    )(x, w1, b1, w2, b2)

    # Drop batch padding only when there actually is padding (avoids an extra
    # full-output copy pass in XLA on the common divisible-batch path).
    if padded:
        out_flat = out_flat[:B]
    return out_flat.reshape((B, CHANNELS, IMG_SIZE, IMG_SIZE))


def init_params(key):
    """Deterministic parameter init mimicking torch.nn.Linear default
    (uniform(-1/sqrt(fan_in), 1/sqrt(fan_in))).  Weights are stored in bf16
    (MXU feed dtype) so no per-call cast is needed; biases stay f32."""
    k1, k2, k3, k4 = jax.random.split(key, 4)
    bound1 = 1.0 / (LATENT_DIM ** 0.5)
    bound2 = 1.0 / (HIDDEN ** 0.5)
    # Weights stored as (in_features, out_features) so the kernel does x @ W.
    w1 = jax.random.uniform(k1, (LATENT_DIM, HIDDEN), jnp.float32,
                            -bound1, bound1).astype(jnp.bfloat16)
    b1 = jax.random.uniform(k2, (1, HIDDEN), jnp.float32, -bound1, bound1)
    w2 = jax.random.uniform(k3, (HIDDEN, OUT_DIM), jnp.float32,
                            -bound2, bound2).astype(jnp.bfloat16)
    b2 = jax.random.uniform(k4, (1, OUT_DIM), jnp.float32, -bound2, bound2)
    return w1, b1, w2, b2


if __name__ == "__main__":
    key = jax.random.PRNGKey(0)
    k_x, k_p = jax.random.split(key)

    B = 2
    x = jax.random.normal(k_x, (B, LATENT_DIM), jnp.float32)
    w1, b1, w2, b2 = init_params(k_p)

    out = generator_forward(x, w1, b1, w2, b2)
    out = jax.block_until_ready(out)

    # Sanity check against plain-JAX f32 reference (kernel uses bf16 MXU
    # operands with f32 accumulation and a bf16 output store, so tolerance is
    # loosened accordingly).
    w1_f = w1.astype(jnp.float32)
    w2_f = w2.astype(jnp.float32)
    h_ref = jnp.maximum(x @ w1_f + b1, 0.0)
    ref = jnp.tanh(h_ref @ w2_f + b2).reshape((B, CHANNELS, IMG_SIZE, IMG_SIZE))
    out_f = out.astype(jnp.float32)
    assert out.shape == (B, CHANNELS, IMG_SIZE, IMG_SIZE)
    assert jnp.allclose(out_f, ref, atol=3e-2, rtol=3e-2), (
        float(jnp.max(jnp.abs(out_f - ref))))

    print("KERNEL_OK")
</pallas_src>

<mosaic_0001>
module attributes {stable_mosaic.version = 11 : i64} {
  func.func @generator_kernel(%arg0: i32, %arg1: memref<16x32xf32, #tpu.memory_space<vmem>>, %arg2: memref<32x256xbf16, #tpu.memory_space<vmem>>, %arg3: memref<1x256xf32, #tpu.memory_space<vmem>>, %arg4: memref<256x1024xbf16, #tpu.memory_space<vmem>>, %arg5: memref<1x1024xf32, #tpu.memory_space<vmem>>, %arg6: memref<16x1024xbf16, #tpu.memory_space<vmem>>) attributes {dimension_semantics = [#tpu.dimension_semantics<parallel>], iteration_bounds = array<i64: 1>, scalar_prefetch = 0 : i64, scratch_operands = 0 : i64, tpu.core_type = #tpu.core_type<tc>, window_params = [{transform_indices = @transform_0, window_bounds = array<i64: 16, 32>}, {pipeline_mode = #tpu.pipeline_mode<synchronous>, transform_indices = @transform_1, window_bounds = array<i64: 32, 256>}, {pipeline_mode = #tpu.pipeline_mode<synchronous>, transform_indices = @transform_2, window_bounds = array<i64: 1, 256>}, {pipeline_mode = #tpu.pipeline_mode<synchronous>, transform_indices = @transform_3, window_bounds = array<i64: 256, 1024>}, {pipeline_mode = #tpu.pipeline_mode<synchronous>, transform_indices = @transform_4, window_bounds = array<i64: 1, 1024>}, {transform_indices = @transform_5, window_bounds = array<i64: 16, 1024>}]} {
    %c0 = arith.constant 0 : index
    %c0_0 = arith.constant 0 : index
    %0 = vector.load %arg1[%c0, %c0_0] : memref<16x32xf32, #tpu.memory_space<vmem>>, vector<16x32xf32>
    %1 = arith.truncf %0 : vector<16x32xf32> to vector<16x32xbf16>
    %c0_1 = arith.constant 0 : index
    %c0_2 = arith.constant 0 : index
    %2 = vector.load %arg2[%c0_1, %c0_2] : memref<32x256xbf16, #tpu.memory_space<vmem>>, vector<32x256xbf16>
    %cst = arith.constant dense<0.000000e+00> : vector<16x256xf32>
    %3 = tpu.matmul %1, %2, %cst {dimension_numbers = #tpu.dot_dimension_numbers<[1], [0], [0], [1], [0, 0, 1, 1], [], []>} : vector<16x32xbf16>, vector<32x256xbf16>, vector<16x256xf32> -> vector<16x256xf32>
    %c0_3 = arith.constant 0 : index
    %c0_4 = arith.constant 0 : index
    %4 = vector.load %arg3[%c0_3, %c0_4] : memref<1x256xf32, #tpu.memory_space<vmem>>, vector<1x256xf32>
    %5 = vector.broadcast %4 : vector<1x256xf32> to vector<16x256xf32>
    %6 = arith.addf %3, %5 : vector<16x256xf32>
    %cst_5 = arith.constant 0.000000e+00 : f32
    %7 = vector.broadcast %cst_5 : f32 to vector<16x256xf32>
    %8 = arith.maximumf %6, %7 : vector<16x256xf32>
    %9 = arith.truncf %8 : vector<16x256xf32> to vector<16x256xbf16>
    %c0_6 = arith.constant 0 : index
    %c0_7 = arith.constant 0 : index
    %10 = vector.load %arg4[%c0_6, %c0_7] : memref<256x1024xbf16, #tpu.memory_space<vmem>>, vector<256x1024xbf16>
    %cst_8 = arith.constant dense<0.000000e+00> : vector<16x1024xf32>
    %11 = tpu.matmul %9, %10, %cst_8 {dimension_numbers = #tpu.dot_dimension_numbers<[1], [0], [0], [1], [0, 0, 1, 1], [], []>} : vector<16x256xbf16>, vector<256x1024xbf16>, vector<16x1024xf32> -> vector<16x1024xf32>
    %c0_9 = arith.constant 0 : index
    %c0_10 = arith.constant 0 : index
    %12 = vector.load %arg5[%c0_9, %c0_10] : memref<1x1024xf32, #tpu.memory_space<vmem>>, vector<1x1024xf32>
    %13 = vector.broadcast %12 : vector<1x1024xf32> to vector<16x1024xf32>
    %14 = arith.addf %11, %13 : vector<16x1024xf32>
    %15 = math.tanh %14 : vector<16x1024xf32>
    %16 = arith.truncf %15 : vector<16x1024xf32> to vector<16x1024xbf16>
    %c0_11 = arith.constant 0 : index
    %c0_12 = arith.constant 0 : index
    %17 = vector.load %arg6[%c0_11, %c0_12] : memref<16x1024xbf16, #tpu.memory_space<vmem>>, vector<16x1024xbf16>
    tpu.vector_store %arg6[%c0_11, %c0_12], %16 {strides = array<i32>} : memref<16x1024xbf16, #tpu.memory_space<vmem>>, vector<16x1024xbf16>,
    return
  }
  func.func @transform_0(%arg0: i32) -> (i32, i32) {
    %c0_i32 = arith.constant 0 : i32
    %c0_i32_0 = arith.constant 0 : i32
    return %arg0, %c0_i32 : i32, i32
  }
  func.func @transform_1(%arg0: i32) -> (i32, i32) {
    %c0_i32 = arith.constant 0 : i32
    %c0_i32_0 = arith.constant 0 : i32
    %c0_i32_1 = arith.constant 0 : i32
    return %c0_i32, %c0_i32_0 : i32, i32
  }
  func.func @transform_2(%arg0: i32) -> (i32, i32) {
    %c0_i32 = arith.constant 0 : i32
    %c0_i32_0 = arith.constant 0 : i32
    %c0_i32_1 = arith.constant 0 : i32
    return %c0_i32, %c0_i32_0 : i32, i32
  }
  func.func @transform_3(%arg0: i32) -> (i32, i32) {
    %c0_i32 = arith.constant 0 : i32
    %c0_i32_0 = arith.constant 0 : i32
    %c0_i32_1 = arith.constant 0 : i32
    return %c0_i32, %c0_i32_0 : i32, i32
  }
  func.func @transform_4(%arg0: i32) -> (i32, i32) {
    %c0_i32 = arith.constant 0 : i32
    %c0_i32_0 = arith.constant 0 : i32
    %c0_i32_1 = arith.constant 0 : i32
    return %c0_i32, %c0_i32_0 : i32, i32
  }
  func.func @transform_5(%arg0: i32) -> (i32, i32) {
    %c0_i32 = arith.constant 0 : i32
    %c0_i32_0 = arith.constant 0 : i32
    return %arg0, %c0_i32 : i32, i32
  }
}

</mosaic_0001>

<llo_original>
// kernel: tpu_custom_call.1
$region0: #{tpu_custom_call.1}
  #allocation0 [shape = 'u32[]', space=smem, size = 0x4, offset = 0x4, fixed_abs, tag = 'smem constant byte address 0x4 - core index']
  #allocation1 [shape = 'u32[144,128]{1,0:T(1,128)}', space=vmem, size = 0x12000, scoped, tag = 'internal scratch']
  %s0 = inlined_call_operand.hbm [shape: f32[16,32], index: 0, kind: input, shape index: {}]
  %s1 = inlined_call_operand.hbm [shape: bf16[32,256], index: 1, kind: input, shape index: {}]
  %s2 = inlined_call_operand.vmem [shape: f32[1,256], index: 2, kind: input, shape index: {}]
  %s3 = inlined_call_operand.hbm [shape: bf16[256,1024], index: 3, kind: input, shape index: {}]
  %s4 = inlined_call_operand.vmem [shape: f32[1,1024], index: 4, kind: input, shape index: {}]
  %s5 = inlined_call_operand.hbm [shape: bf16[16,1024], index: 5, kind: output, shape index: {}]
  %s6 = sld [smem:[#allocation0]]
  $region42: #{tpu_custom_call.1} parent=0
    _
  %s8 = ssub.s32 1, %s6
  %s9 = scalar_select 0, %s8, %s6
  $region1: #{tpu_custom_call.1} parent=0
    #allocation2 [shape = 'u8[8192]{0}', space=vmem, size = 0x2000, scoped, tag = 'input window, operand 0, single buffered']
    #allocation3 [shape = 's32[1]{0}', space=sflag, size = 0x4, scoped, tag = 'scoped memory for tpu_custom_call.1']
    #allocation4 [shape = 's32[1]{0}', space=sflag, size = 0x4, scoped, tag = 'scoped memory for tpu_custom_call.1']
    #allocation5 [shape = 'u8[16384]{0}', space=vmem, size = 0x4000, scoped, tag = 'input window, operand 1, single buffered']
    #allocation6 [shape = 's32[1]{0}', space=sflag, size = 0x4, scoped, tag = 'scoped memory for tpu_custom_call.1']
    #allocation7 [shape = 'u8[524288]{0}', space=vmem, size = 0x80000, scoped, tag = 'input window, operand 3, single buffered']
    #allocation8 [shape = 'u8[32768]{0}', space=vmem, size = 0x8000, scoped, tag = 'output window, operand 0, single buffered']
    %10 = vsyncpa [#allocation3], 0
    %11 = vsyncpa [#allocation6], 0
    %12 = vsyncpa [#allocation4], 0
    // Predicated region
    $region2: #{tpu_custom_call.1} parent=1 // pred_check
      _
    $region3: #{tpu_custom_call.1} parent=1 // pred_check_branch
      %14 = sbr.rel (0) target = $region5
    $region4: #{tpu_custom_call.1} parent=1 // pred_region
      %s16 = ssub.s32 256, 256
      %17 = vsyncadd [#allocation3], %s16
      %s18 = sshll.u32 [#allocation2], 4
      %s19 = int_to_ptr.vmem [resolvable:$true] %s18
      %24 = dma.hbm_to_vmem [thread:$0]  %s0, 256, %s19, [#allocation3], 128, 128, 8
    $region5: #{tpu_custom_call.1} parent=1 // pred_fallthru
      _
    // Predicated region
    $region6: #{tpu_custom_call.1} parent=1 // pred_check
      _
    $region7: #{tpu_custom_call.1} parent=1 // pred_check_branch
      %26 = sbr.rel (0) target = $region9
    $region8: #{tpu_custom_call.1} parent=1 // pred_region
      %s28 = ssub.s32 512, 512
      %29 = vsyncadd [#allocation6], %s28
      %s30 = sshll.u32 [#allocation5], 4
      %s31 = int_to_ptr.vmem [resolvable:$true] %s30
      %36 = dma.hbm_to_vmem [thread:$0]  %s1, 512, %s31, [#allocation6], 128, 128, 8
    $region9: #{tpu_custom_call.1} parent=1 // pred_fallthru
      _
    // Predicated region
    $region10: #{tpu_custom_call.1} parent=1 // pred_check
      _
    $region11: #{tpu_custom_call.1} parent=1 // pred_check_branch
      %38 = sbr.rel (0) target = $region13
    $region12: #{tpu_custom_call.1} parent=1 // pred_region
      _
    $region13: #{tpu_custom_call.1} parent=1 // pred_fallthru
      _
    // Predicated region
    $region14: #{tpu_custom_call.1} parent=1 // pred_check
      _
    $region15: #{tpu_custom_call.1} parent=1 // pred_check_branch
      %40 = sbr.rel (0) target = $region17
    $region16: #{tpu_custom_call.1} parent=1 // pred_region
      %s42 = ssub.s32 16384, 16384
      %43 = vsyncadd [#allocation6], %s42
      %s44 = sshll.u32 [#allocation7], 4
      %s45 = int_to_ptr.vmem [resolvable:$true] %s44
      %50 = dma.hbm_to_vmem [thread:$0]  %s3, 16384, %s45, [#allocation6], 512, 512, 32
    $region17: #{tpu_custom_call.1} parent=1 // pred_fallthru
      _
    // Predicated region
    $region18: #{tpu_custom_call.1} parent=1 // pred_check
      _
    $region19: #{tpu_custom_call.1} parent=1 // pred_check_branch
      %52 = sbr.rel (0) target = $region21
    $region20: #{tpu_custom_call.1} parent=1 // pred_region
      _
    $region21: #{tpu_custom_call.1} parent=1 // pred_fallthru
      _
    // Predicated region
    $region22: #{tpu_custom_call.1} parent=1 // pred_check
      _
    $region23: #{tpu_custom_call.1} parent=1 // pred_check_branch
      %54 = sbr.rel (0) target = $region25
    $region24: #{tpu_custom_call.1} parent=1 // pred_region
      %55 = dma.done [#allocation3], 256
    $region25: #{tpu_custom_call.1} parent=1 // pred_fallthru
      _
    // Predicated region
    $region26: #{tpu_custom_call.1} parent=1 // pred_check
      _
    $region27: #{tpu_custom_call.1} parent=1 // pred_check_branch
      %57 = sbr.rel (0) target = $region29
    $region28: #{tpu_custom_call.1} parent=1 // pred_region
      %58 = dma.done [#allocation6], 512
    $region29: #{tpu_custom_call.1} parent=1 // pred_fallthru
      _
    // Predicated region
    $region30: #{tpu_custom_call.1} parent=1 // pred_check
      _
    $region31: #{tpu_custom_call.1} parent=1 // pred_check_branch
      %60 = sbr.rel (0) target = $region33
    $region32: #{tpu_custom_call.1} parent=1 // pred_region
      %61 = dma.done [#allocation6], 16384
    $region33: #{tpu_custom_call.1} parent=1 // pred_fallthru
      _
    %v63 = vld [vmem:[#allocation2] sm:$0xff]
    %v64 = vld [vmem:[#allocation2 + $0x8] sm:$0xff]
    %v65 = vpack.c.bf16 %v64, %v63
    %v66 = vld [vmem:[#allocation5] sm:$0xff]
    %v67 = vld [vmem:[#allocation5 + $0x8] sm:$0xff]
    %v68 = vld [vmem:[#allocation5 + $0x10] sm:$0xff]
    %v69 = vld [vmem:[#allocation5 + $0x18] sm:$0xff]
    %v70 = vld [vmem:[%s2] sm:$0x3]
    %v72 = vlaneseq
    %v73 = vshrl.u32 %v72, 7
    %v74 = vsub.s32 0, %v73
    %v75 = vrot.slane %v70, %v74
    %v76 = vlaneseq
    %v77 = vshrl.u32 %v76, 7
    %v78 = vsub.s32 1, %v77
    %v79 = vrot.slane %v70, %v78
    %v86 = vunpack.c.l.b16 %v66
    %v87 = vunpack.c.h.b16 %v66
    %v88 = vunpack.c.l.b16 %v67
    %v89 = vunpack.c.h.b16 %v67
    %v90 = vunpack.c.l.b16 %v68
    %v91 = vunpack.c.h.b16 %v68
    %v92 = vunpack.c.l.b16 %v69
    %v93 = vunpack.c.h.b16 %v69
    %v94 = vpack.c.b16 %v88, %v86
    %v95 = vpack.c.b16 %v89, %v87
    %v96 = vpack.c.b16 %v92, %v90
    %v97 = vpack.c.b16 %v93, %v91
    %vm102 = vcmask 261120
    %v104 = vsel %vm102, %v65, 0
    %106 = vmatprep.subr.bf16.mxu0 %v95
    %107 = vmatpush1.bf16.msra.mxu0 %v94
    %108 = vmatprep.subr.bf16.mxu0 %v97
    %109 = vmatpush1.bf16.msra.mxu0 %v96
    %110 = vmatprep.subr.bf16.mxu0 0
    %111 = vmatpush1.bf16.msra.mxu0 0
    %112 = vmatprep.subr.bf16.mxu0 0
    %113 = vmatpush1.bf16.msra.mxu0 0
    %114 = vmatprep.subr.bf16.mxu0 0
    %115 = vmatpush1.bf16.msra.mxu0 0
    %116 = vmatprep.subr.bf16.mxu0 0
    %117 = vmatpush1.bf16.msra.mxu0 0
    %118 = vmatprep.subr.bf16.mxu0 0
    %119 = vmatpush1.bf16.msra.mxu0 0
    %120 = vmatprep.subr.bf16.mxu0 0
    %121 = vmatpush1.bf16.msra.mxu0 0
    %122 = vmatprep.subr.bf16.mxu0 0
    %123 = vmatpush1.bf16.msra.mxu0 0
    %124 = vmatprep.subr.bf16.mxu0 0
    %125 = vmatpush1.bf16.msra.mxu0 0
    %126 = vmatprep.subr.bf16.mxu0 0
    %127 = vmatpush1.bf16.msra.mxu0 0
    %128 = vmatprep.subr.bf16.mxu0 0
    %129 = vmatpush1.bf16.msra.mxu0 0
    %130 = vmatprep.subr.bf16.mxu0 0
    %131 = vmatpush1.bf16.msra.mxu0 0
    %132 = vmatprep.subr.bf16.mxu0 0
    %133 = vmatpush1.bf16.msra.mxu0 0
    %134 = vmatprep.subr.bf16.mxu0 0
    %135 = vmatpush1.bf16.msra.mxu0 0
    %136 = vmatprep.subr.bf16.mxu0 0
    %137 = vmatpush1.bf16.msra.mxu0 0
    %138 = vmatprep.mubr.bf16.mxu0 0
    %139 = vmatmul.mubr.bf16.gmra.mrb[0].mxu0 %v104
    %v140 = vpop.f32.mrb[0].mxu0
    %v141 = vadd.f32 %v75, %v140
    %v142 = vpop.f32.mrb[0].mxu0
    %v143 = vadd.f32 %v79, %v142
    %v144 = vpop.f32.mrb[0].mxu0
    %v145 = vadd.f32 %v75, %v144
    %v146 = vpop.f32.mrb[0].mxu0
    %v147 = vadd.f32 %v79, %v146
    %148 = vdwg.mxu0
    %v149 = vmax.f32 %v141, 0.0
    %v150 = vmax.f32 %v143, 0.0
    %v151 = vmax.f32 %v145, 0.0
    %v152 = vmax.f32 %v147, 0.0
    %v153 = vpack.c.bf16 %v151, %v149
    %v154 = vpack.c.bf16 %v152, %v150
    %v155 = vld [vmem:[#allocation7] sm:$0xff]
    %v156 = vld [vmem:[#allocation7 + $0x8] sm:$0xff]
    %v157 = vld [vmem:[#allocation7 + $0x10] sm:$0xff]
    %v158 = vld [vmem:[#allocation7 + $0x18] sm:$0xff]
    %v159 = vld [vmem:[#allocation7 + $0x20] sm:$0xff]
    %v160 = vld [vmem:[#allocation7 + $0x28] sm:$0xff]
    %v161 = vld [vmem:[#allocation7 + $0x30] sm:$0xff]
    %v162 = vld [vmem:[#allocation7 + $0x38] sm:$0xff]
    %v163 = vld [vmem:[#allocation7 + $0x40] sm:$0xff]
    %v164 = vld [vmem:[#allocation7 + $0x48] sm:$0xff]
    %v165 = vld [vmem:[#allocation7 + $0x50] sm:$0xff]
    %v166 = vld [vmem:[#allocation7 + $0x58] sm:$0xff]
    %v167 = vld [vmem:[#allocation7 + $0x60] sm:$0xff]
    %v168 = vld [vmem:[#allocation7 + $0x68] sm:$0xff]
    %v169 = vld [vmem:[#allocation7 + $0x70] sm:$0xff]
    %v170 = vld [vmem:[#allocation7 + $0x78] sm:$0xff]
    %v171 = vld [vmem:[#allocation7 + $0x80] sm:$0xff]
    %v172 = vld [vmem:[#allocation7 + $0x88] sm:$0xff]
    %v173 = vld [vmem:[#allocation7 + $0x90] sm:$0xff]
    %v174 = vld [vmem:[#allocation7 + $0x98] sm:$0xff]
    %v175 = vld [vmem:[#allocation7 + $0xa0] sm:$0xff]
    %v176 = vld [vmem:[#allocation7 + $0xa8] sm:$0xff]
    %v177 = vld [vmem:[#allocation7 + $0xb0] sm:$0xff]
    %v178 = vld [vmem:[#allocation7 + $0xb8] sm:$0xff]
    %v179 = vld [vmem:[#allocation7 + $0xc0] sm:$0xff]
    %v180 = vld [vmem:[#allocation7 + $0xc8] sm:$0xff]
    %v181 = vld [vmem:[#allocation7 + $0xd0] sm:$0xff]
    %v182 = vld [vmem:[#allocation7 + $0xd8] sm:$0xff]
    %v183 = vld [vmem:[#allocation7 + $0xe0] sm:$0xff]
    %v184 = vld [vmem:[#allocation7 + $0xe8] sm:$0xff]
    %v185 = vld [vmem:[#allocation7 + $0xf0] sm:$0xff]
    %v186 = vld [vmem:[#allocation7 + $0xf8] sm:$0xff]
    %v187 = vld [vmem:[#allocation7 + $0x100] sm:$0xff]
    %v188 = vld [vmem:[#allocation7 + $0x108] sm:$0xff]
    %v189 = vld [vmem:[#allocation7 + $0x110] sm:$0xff]
    %v190 = vld [vmem:[#allocation7 + $0x118] sm:$0xff]
    %v191 = vld [vmem:[#allocation7 + $0x120] sm:$0xff]
    %v192 = vld [vmem:[#allocation7 + $0x128] sm:$0xff]
    %v193 = vld [vmem:[#allocation7 + $0x130] sm:$0xff]
    %v194 = vld [vmem:[#allocation7 + $0x138] sm:$0xff]
    %v195 = vld [vmem:[#allocation7 + $0x140] sm:$0xff]
    %v196 = vld [vmem:[#allocation7 + $0x148] sm:$0xff]
    %v197 = vld [vmem:[#allocation7 + $0x150] sm:$0xff]
    %v198 = vld [vmem:[#allocation7 + $0x158] sm:$0xff]
    %v199 = vld [vmem:[#allocation7 + $0x160] sm:$0xff]
    %v200 = vld [vmem:[#allocation7 + $0x168] sm:$0xff]
    %v201 = vld [vmem:[#allocation7 + $0x170] sm:$0xff]
    %v202 = vld [vmem:[#allocation7 + $0x178] sm:$0xff]
    %v203 = vld [vmem:[#allocation7 + $0x180] sm:$0xff]
    %v204 = vld [vmem:[#allocation7 + $0x188] sm:$0xff]
    %v205 = vld [vmem:[#allocation7 + $0x190] sm:$0xff]
    %v206 = vld [vmem:[#allocation7 + $0x198] sm:$0xff]
    %v207 = vld [vmem:[#allocation7 + $0x1a0] sm:$0xff]
    %v208 = vld [vmem:[#allocation7 + $0x1a8] sm:$0xff]
    %v209 = vld [vmem:[#allocation7 + $0x1b0] sm:$0xff]
    %v210 = vld [vmem:[#allocation7 + $0x1b8] sm:$0xff]
    %v211 = vld [vmem:[#allocation7 + $0x1c0] sm:$0xff]
    %v212 = vld [vmem:[#allocation7 + $0x1c8] sm:$0xff]
    %v213 = vld [vmem:[#allocation7 + $0x1d0] sm:$0xff]
    %v214 = vld [vmem:[#allocation7 + $0x1d8] sm:$0xff]
    %v215 = vld [vmem:[#allocation7 + $0x1e0] sm:$0xff]
    %v216 = vld [vmem:[#allocation7 + $0x1e8] sm:$0xff]
    %v217 = vld [vmem:[#allocation7 + $0x1f0] sm:$0xff]
    %v218 = vld [vmem:[#allocation7 + $0x1f8] sm:$0xff]
    %v219 = vld [vmem:[#allocation7 + $0x200] sm:$0xff]
    %v220 = vld [vmem:[#allocation7 + $0x208] sm:$0xff]
    %v221 = vld [vmem:[#allocation7 + $0x210] sm:$0xff]
    %v222 = vld [vmem:[#allocation7 + $0x218] sm:$0xff]
    %v223 = vld [vmem:[#allocation7 + $0x220] sm:$0xff]
    %v224 = vld [vmem:[#allocation7 + $0x228] sm:$0xff]
    %v225 = vld [vmem:[#allocation7 + $0x230] sm:$0xff]
    %v226 = vld [vmem:[#allocation7 + $0x238] sm:$0xff]
    %v227 = vld [vmem:[#allocation7 + $0x240] sm:$0xff]
    %v228 = vld [vmem:[#allocation7 + $0x248] sm:$0xff]
    %v229 = vld [vmem:[#allocation7 + $0x250] sm:$0xff]
    %v230 = vld [vmem:[#allocation7 + $0x258] sm:$0xff]
    %v231 = vld [vmem:[#allocation7 + $0x260] sm:$0xff]
    %v232 = vld [vmem:[#allocation7 + $0x268] sm:$0xff]
    %v233 = vld [vmem:[#allocation7 + $0x270] sm:$0xff]
    %v234 = vld [vmem:[#allocation7 + $0x278] sm:$0xff]
    %v235 = vld [vmem:[#allocation7 + $0x280] sm:$0xff]
    %v236 = vld [vmem:[#allocation7 + $0x288] sm:$0xff]
    %v237 = vld [vmem:[#allocation7 + $0x290] sm:$0xff]
    %v238 = vld [vmem:[#allocation7 + $0x298] sm:$0xff]
    %v239 = vld [vmem:[#allocation7 + $0x2a0] sm:$0xff]
    %v240 = vld [vmem:[#allocation7 + $0x2a8] sm:$0xff]
    %v241 = vld [vmem:[#allocation7 + $0x2b0] sm:$0xff]
    %v242 = vld [vmem:[#allocation7 + $0x2b8] sm:$0xff]
    %v243 = vld [vmem:[#allocation7 + $0x2c0] sm:$0xff]
    %v244 = vld [vmem:[#allocation7 + $0x2c8] sm:$0xff]
    %v245 = vld [vmem:[#allocation7 + $0x2d0] sm:$0xff]
    %v246 = vld [vmem:[#allocation7 + $0x2d8] sm:$0xff]
    %v247 = vld [vmem:[#allocation7 + $0x2e0] sm:$0xff]
    %v248 = vld [vmem:[#allocation7 + $0x2e8] sm:$0xff]
    %v249 = vld [vmem:[#allocation7 + $0x2f0] sm:$0xff]
    %v250 = vld [vmem:[#allocation7 + $0x2f8] sm:$0xff]
    %v251 = vld [vmem:[#allocation7 + $0x300] sm:$0xff]
    %v252 = vld [vmem:[#allocation7 + $0x308] sm:$0xff]
    %v253 = vld [vmem:[#allocation7 + $0x310] sm:$0xff]
    %v254 = vld [vmem:[#allocation7 + $0x318] sm:$0xff]
    %v255 = vld [vmem:[#allocation7 + $0x320] sm:$0xff]
    %v256 = vld [vmem:[#allocation7 + $0x328] sm:$0xff]
    %v257 = vld [vmem:[#allocation7 + $0x330] sm:$0xff]
    %v258 = vld [vmem:[#allocation7 + $0x338] sm:$0xff]
    %v259 = vld [vmem:[#allocation7 + $0x340] sm:$0xff]
    %v260 = vld [vmem:[#allocation7 + $0x348] sm:$0xff]
    %v261 = vld [vmem:[#allocation7 + $0x350] sm:$0xff]
    %v262 = vld [vmem:[#allocation7 + $0x358] sm:$0xff]
    %v263 = vld [vmem:[#allocation7 + $0x360] sm:$0xff]
    %v264 = vld [vmem:[#allocation7 + $0x368] sm:$0xff]
    %v265 = vld [vmem:[#allocation7 + $0x370] sm:$0xff]
    %v266 = vld [vmem:[#allocation7 + $0x378] sm:$0xff]
    %v267 = vld [vmem:[#allocation7 + $0x380] sm:$0xff]
    %v268 = vld [vmem:[#allocation7 + $0x388] sm:$0xff]
    %v269 = vld [vmem:[#allocation7 + $0x390] sm:$0xff]
    %v270 = vld [vmem:[#allocation7 + $0x398] sm:$0xff]
    %v271 = vld [vmem:[#allocation7 + $0x3a0] sm:$0xff]
    %v272 = vld [vmem:[#allocation7 + $0x3a8] sm:$0xff]
    %v273 = vld [vmem:[#allocation7 + $0x3b0] sm:$0xff]
    %v274 = vld [vmem:[#allocation7 + $0x3b8] sm:$0xff]
    %v275 = vld [vmem:[#allocation7 + $0x3c0] sm:$0xff]
    %v276 = vld [vmem:[#allocation7 + $0x3c8] sm:$0xff]
    %v277 = vld [vmem:[#allocation7 + $0x3d0] sm:$0xff]
    %v278 = vld [vmem:[#allocation7 + $0x3d8] sm:$0xff]
    %v279 = vld [vmem:[#allocation7 + $0x3e0] sm:$0xff]
    %v280 = vld [vmem:[#allocation7 + $0x3e8] sm:$0xff]
    %v281 = vld [vmem:[#allocation7 + $0x3f0] sm:$0xff]
    %v282 = vld [vmem:[#allocation7 + $0x3f8] sm:$0xff]
    %v283 = vld [vmem:[%s4] sm:$0xff]
    %v285 = vlaneseq
    %v286 = vshrl.u32 %v285, 7
    %v287 = vsub.s32 0, %v286
    %v288 = vrot.slane %v283, %v287
    %v289 = vlaneseq
    %v290 = vshrl.u32 %v289, 7
    %v291 = vsub.s32 1, %v290
    %v292 = vrot.slane %v283, %v291
    %v293 = vlaneseq
    %v294 = vshrl.u32 %v293, 7
    %v295 = vsub.s32 2, %v294
    %v296 = vrot.slane %v283, %v295
    %v297 = vlaneseq
    %v298 = vshrl.u32 %v297, 7
    %v299 = vsub.s32 3, %v298
    %v300 = vrot.slane %v283, %v299
    %v301 = vlaneseq
    %v302 = vshrl.u32 %v301, 7
    %v303 = vsub.s32 4, %v302
    %v304 = vrot.slane %v283, %v303
    %v305 = vlaneseq
    %v306 = vshrl.u32 %v305, 7
    %v307 = vsub.s32 5, %v306
    %v308 = vrot.slane %v283, %v307
    %v309 = vlaneseq
    %v310 = vshrl.u32 %v309, 7
    %v311 = vsub.s32 6, %v310
    %v312 = vrot.slane %v283, %v311
    %v313 = vlaneseq
    %v314 = vshrl.u32 %v313, 7
    %v315 = vsub.s32 7, %v314
    %v316 = vrot.slane %v283, %v315
    %v453 = vunpack.c.l.b16 %v155
    %v454 = vunpack.c.h.b16 %v155
    %v455 = vunpack.c.l.b16 %v156
    %v456 = vunpack.c.h.b16 %v156
    %v457 = vunpack.c.l.b16 %v157
    %v458 = vunpack.c.h.b16 %v157
    %v459 = vunpack.c.l.b16 %v158
    %v460 = vunpack.c.h.b16 %v158
    %v461 = vunpack.c.l.b16 %v159
    %v462 = vunpack.c.h.b16 %v159
    %v463 = vunpack.c.l.b16 %v160
    %v464 = vunpack.c.h.b16 %v160
    %v465 = vunpack.c.l.b16 %v161
    %v466 = vunpack.c.h.b16 %v161
    %v467 = vunpack.c.l.b16 %v162
    %v468 = vunpack.c.h.b16 %v162
    %v469 = vunpack.c.l.b16 %v163
    %v470 = vunpack.c.h.b16 %v163
    %v471 = vunpack.c.l.b16 %v164
    %v472 = vunpack.c.h.b16 %v164
    %v473 = vunpack.c.l.b16 %v165
    %v474 = vunpack.c.h.b16 %v165
    %v475 = vunpack.c.l.b16 %v166
    %v476 = vunpack.c.h.b16 %v166
    %v477 = vunpack.c.l.b16 %v167
    %v478 = vunpack.c.h.b16 %v167
    %v479 = vunpack.c.l.b16 %v168
    %v480 = vunpack.c.h.b16 %v168
    %v481 = vunpack.c.l.b16 %v169
    %v482 = vunpack.c.h.b16 %v169
    %v483 = vunpack.c.l.b16 %v170
    %v484 = vunpack.c.h.b16 %v170
    %v485 = vunpack.c.l.b16 %v171
    %v486 = vunpack.c.h.b16 %v171
    %v487 = vunpack.c.l.b16 %v172
    %v488 = vunpack.c.h.b16 %v172
    %v489 = vunpack.c.l.b16 %v173
    %v490 = vunpack.c.h.b16 %v173
    %v491 = vunpack.c.l.b16 %v174
    %v492 = vunpack.c.h.b16 %v174
    %v493 = vunpack.c.l.b16 %v175
    %v494 = vunpack.c.h.b16 %v175
    %v495 = vunpack.c.l.b16 %v176
    %v496 = vunpack.c.h.b16 %v176
    %v497 = vunpack.c.l.b16 %v177
    %v498 = vunpack.c.h.b16 %v177
    %v499 = vunpack.c.l.b16 %v178
    %v500 = vunpack.c.h.b16 %v178
    %v501 = vunpack.c.l.b16 %v179
    %v502 = vunpack.c.h.b16 %v179
    %v503 = vunpack.c.l.b16 %v180
    %v504 = vunpack.c.h.b16 %v180
    %v505 = vunpack.c.l.b16 %v181
    %v506 = vunpack.c.h.b16 %v181
    %v507 = vunpack.c.l.b16 %v182
    %v508 = vunpack.c.h.b16 %v182
    %v509 = vunpack.c.l.b16 %v183
    %v510 = vunpack.c.h.b16 %v183
    %v511 = vunpack.c.l.b16 %v184
    %v512 = vunpack.c.h.b16 %v184
    %v513 = vunpack.c.l.b16 %v185
    %v514 = vunpack.c.h.b16 %v185
    %v515 = vunpack.c.l.b16 %v186
    %v516 = vunpack.c.h.b16 %v186
    %v517 = vunpack.c.l.b16 %v187
    %v518 = vunpack.c.h.b16 %v187
    %v519 = vunpack.c.l.b16 %v188
    %v520 = vunpack.c.h.b16 %v188
    %v521 = vunpack.c.l.b16 %v189
    %v522 = vunpack.c.h.b16 %v189
    %v523 = vunpack.c.l.b16 %v190
    %v524 = vunpack.c.h.b16 %v190
    %v525 = vunpack.c.l.b16 %v191
    %v526 = vunpack.c.h.b16 %v191
    %v527 = vunpack.c.l.b16 %v192
    %v528 = vunpack.c.h.b16 %v192
    %v529 = vunpack.c.l.b16 %v193
    %v530 = vunpack.c.h.b16 %v193
    %v531 = vunpack.c.l.b16 %v194
    %v532 = vunpack.c.h.b16 %v194
    %v533 = vunpack.c.l.b16 %v195
    %v534 = vunpack.c.h.b16 %v195
    %v535 = vunpack.c.l.b16 %v196
    %v536 = vunpack.c.h.b16 %v196
    %v537 = vunpack.c.l.b16 %v197
    %v538 = vunpack.c.h.b16 %v197
    %v539 = vunpack.c.l.b16 %v198
    %v540 = vunpack.c.h.b16 %v198
    %v541 = vunpack.c.l.b16 %v199
    %v542 = vunpack.c.h.b16 %v199
    %v543 = vunpack.c.l.b16 %v200
    %v544 = vunpack.c.h.b16 %v200
    %v545 = vunpack.c.l.b16 %v201
    %v546 = vunpack.c.h.b16 %v201
    %v547 = vunpack.c.l.b16 %v202
    %v548 = vunpack.c.h.b16 %v202
    %v549 = vunpack.c.l.b16 %v203
    %v550 = vunpack.c.h.b16 %v203
    %v551 = vunpack.c.l.b16 %v204
    %v552 = vunpack.c.h.b16 %v204
    %v553 = vunpack.c.l.b16 %v205
    %v554 = vunpack.c.h.b16 %v205
    %v555 = vunpack.c.l.b16 %v206
    %v556 = vunpack.c.h.b16 %v206
    %v557 = vunpack.c.l.b16 %v207
    %v558 = vunpack.c.h.b16 %v207
    %v559 = vunpack.c.l.b16 %v208
    %v560 = vunpack.c.h.b16 %v208
    %v561 = vunpack.c.l.b16 %v209
    %v562 = vunpack.c.h.b16 %v209
    %v563 = vunpack.c.l.b16 %v210
    %v564 = vunpack.c.h.b16 %v210
    %v565 = vunpack.c.l.b16 %v211
    %v566 = vunpack.c.h.b16 %v211
    %v567 = vunpack.c.l.b16 %v212
    %v568 = vunpack.c.h.b16 %v212
    %v569 = vunpack.c.l.b16 %v213
    %v570 = vunpack.c.h.b16 %v213
    %v571 = vunpack.c.l.b16 %v214
    %v572 = vunpack.c.h.b16 %v214
    %v573 = vunpack.c.l.b16 %v215
    %v574 = vunpack.c.h.b16 %v215
    %v575 = vunpack.c.l.b16 %v216
    %v576 = vunpack.c.h.b16 %v216
    %v577 = vunpack.c.l.b16 %v217
    %v578 = vunpack.c.h.b16 %v217
    %v579 = vunpack.c.l.b16 %v218
    %v580 = vunpack.c.h.b16 %v218
    %v581 = vunpack.c.l.b16 %v219
    %v582 = vunpack.c.h.b16 %v219
    %v583 = vunpack.c.l.b16 %v220
    %v584 = vunpack.c.h.b16 %v220
    %v585 = vunpack.c.l.b16 %v221
    %v586 = vunpack.c.h.b16 %v221
    %v587 = vunpack.c.l.b16 %v222
    %v588 = vunpack.c.h.b16 %v222
    %v589 = vunpack.c.l.b16 %v223
    %v590 = vunpack.c.h.b16 %v223
    %v591 = vunpack.c.l.b16 %v224
    %v592 = vunpack.c.h.b16 %v224
    %v593 = vunpack.c.l.b16 %v225
    %v594 = vunpack.c.h.b16 %v225
    %v595 = vunpack.c.l.b16 %v226
    %v596 = vunpack.c.h.b16 %v226
    %v597 = vunpack.c.l.b16 %v227
    %v598 = vunpack.c.h.b16 %v227
    %v599 = vunpack.c.l.b16 %v228
    %v600 = vunpack.c.h.b16 %v228
    %v601 = vunpack.c.l.b16 %v229
    %v602 = vunpack.c.h.b16 %v229
    %v603 = vunpack.c.l.b16 %v230
    %v604 = vunpack.c.h.b16 %v230
    %v605 = vunpack.c.l.b16 %v231
    %v606 = vunpack.c.h.b16 %v231
    %v607 = vunpack.c.l.b16 %v232
    %v608 = vunpack.c.h.b16 %v232
    %v609 = vunpack.c.l.b16 %v233
    %v610 = vunpack.c.h.b16 %v233
    %v611 = vunpack.c.l.b16 %v234
    %v612 = vunpack.c.h.b16 %v234
    %v613 = vunpack.c.l.b16 %v235
    %v614 = vunpack.c.h.b16 %v235
    %v615 = vunpack.c.l.b16 %v236
    %v616 = vunpack.c.h.b16 %v236
    %v617 = vunpack.c.l.b16 %v237
    %v618 = vunpack.c.h.b16 %v237
    %v619 = vunpack.c.l.b16 %v238
    %v620 = vunpack.c.h.b16 %v238
    %v621 = vunpack.c.l.b16 %v239
    %v622 = vunpack.c.h.b16 %v239
    %v623 = vunpack.c.l.b16 %v240
    %v624 = vunpack.c.h.b16 %v240
    %v625 = vunpack.c.l.b16 %v241
    %v626 = vunpack.c.h.b16 %v241
    %v627 = vunpack.c.l.b16 %v242
    %v628 = vunpack.c.h.b16 %v242
    %v629 = vunpack.c.l.b16 %v243
    %v630 = vunpack.c.h.b16 %v243
    %v631 = vunpack.c.l.b16 %v244
    %v632 = vunpack.c.h.b16 %v244
    %v633 = vunpack.c.l.b16 %v245
    %v634 = vunpack.c.h.b16 %v245
    %v635 = vunpack.c.l.b16 %v246
    %v636 = vunpack.c.h.b16 %v246
    %v637 = vunpack.c.l.b16 %v247
    %v638 = vunpack.c.h.b16 %v247
    %v639 = vunpack.c.l.b16 %v248
    %v640 = vunpack.c.h.b16 %v248
    %v641 = vunpack.c.l.b16 %v249
    %v642 = vunpack.c.h.b16 %v249
    %v643 = vunpack.c.l.b16 %v250
    %v644 = vunpack.c.h.b16 %v250
    %v645 = vunpack.c.l.b16 %v251
    %v646 = vunpack.c.h.b16 %v251
    %v647 = vunpack.c.l.b16 %v252
    %v648 = vunpack.c.h.b16 %v252
    %v649 = vunpack.c.l.b16 %v253
    %v650 = vunpack.c.h.b16 %v253
    %v651 = vunpack.c.l.b16 %v254
    %v652 = vunpack.c.h.b16 %v254
    %v653 = vunpack.c.l.b16 %v255
    %v654 = vunpack.c.h.b16 %v255
    %v655 = vunpack.c.l.b16 %v256
    %v656 = vunpack.c.h.b16 %v256
    %v657 = vunpack.c.l.b16 %v257
    %v658 = vunpack.c.h.b16 %v257
    %v659 = vunpack.c.l.b16 %v258
    %v660 = vunpack.c.h.b16 %v258
    %v661 = vunpack.c.l.b16 %v259
    %v662 = vunpack.c.h.b16 %v259
    %v663 = vunpack.c.l.b16 %v260
    %v664 = vunpack.c.h.b16 %v260
    %v665 = vunpack.c.l.b16 %v261
    %v666 = vunpack.c.h.b16 %v261
    %v667 = vunpack.c.l.b16 %v262
    %v668 = vunpack.c.h.b16 %v262
    %v669 = vunpack.c.l.b16 %v263
    %v670 = vunpack.c.h.b16 %v263
    %v671 = vunpack.c.l.b16 %v264
    %v672 = vunpack.c.h.b16 %v264
    %v673 = vunpack.c.l.b16 %v265
    %v674 = vunpack.c.h.b16 %v265
    %v675 = vunpack.c.l.b16 %v266
    %v676 = vunpack.c.h.b16 %v266
    %v677 = vunpack.c.l.b16 %v267
    %v678 = vunpack.c.h.b16 %v267
    %v679 = vunpack.c.l.b16 %v268
    %v680 = vunpack.c.h.b16 %v268
    %v681 = vunpack.c.l.b16 %v269
    %v682 = vunpack.c.h.b16 %v269
    %v683 = vunpack.c.l.b16 %v270
    %v684 = vunpack.c.h.b16 %v270
    %v685 = vunpack.c.l.b16 %v271
    %v686 = vunpack.c.h.b16 %v271
    %v687 = vunpack.c.l.b16 %v272
    %v688 = vunpack.c.h.b16 %v272
    %v689 = vunpack.c.l.b16 %v273
    %v690 = vunpack.c.h.b16 %v273
    %v691 = vunpack.c.l.b16 %v274
    %v692 = vunpack.c.h.b16 %v274
    %v693 = vunpack.c.l.b16 %v275
    %v694 = vunpack.c.h.b16 %v275
    %v695 = vunpack.c.l.b16 %v276
    %v696 = vunpack.c.h.b16 %v276
    %v697 = vunpack.c.l.b16 %v277
    %v698 = vunpack.c.h.b16 %v277
    %v699 = vunpack.c.l.b16 %v278
    %v700 = vunpack.c.h.b16 %v278
    %v701 = vunpack.c.l.b16 %v279
    %v702 = vunpack.c.h.b16 %v279
    %v703 = vunpack.c.l.b16 %v280
    %v704 = vunpack.c.h.b16 %v280
    %v705 = vunpack.c.l.b16 %v281
    %v706 = vunpack.c.h.b16 %v281
    %v707 = vunpack.c.l.b16 %v282
    %v708 = vunpack.c.h.b16 %v282
    %v709 = vpack.c.b16 %v461, %v453
    %v710 = vpack.c.b16 %v462, %v454
    %v711 = vpack.c.b16 %v463, %v455
    %v712 = vpack.c.b16 %v464, %v456
    %v713 = vpack.c.b16 %v465, %v457
    %v714 = vpack.c.b16 %v466, %v458
    %v715 = vpack.c.b16 %v467, %v459
    %v716 = vpack.c.b16 %v468, %v460
    %v717 = vpack.c.b16 %v477, %v469
    %v718 = vpack.c.b16 %v478, %v470
    %v719 = vpack.c.b16 %v479, %v471
    %v720 = vpack.c.b16 %v480, %v472
    %v721 = vpack.c.b16 %v481, %v473
    %v722 = vpack.c.b16 %v482, %v474
    %v723 = vpack.c.b16 %v483, %v475
    %v724 = vpack.c.b16 %v484, %v476
    %v725 = vpack.c.b16 %v493, %v485
    %v726 = vpack.c.b16 %v494, %v486
    %v727 = vpack.c.b16 %v495, %v487
    %v728 = vpack.c.b16 %v496, %v488
    %v729 = vpack.c.b16 %v497, %v489
    %v730 = vpack.c.b16 %v498, %v490
    %v731 = vpack.c.b16 %v499, %v491
    %v732 = vpack.c.b16 %v500, %v492
    %v733 = vpack.c.b16 %v509, %v501
    %v734 = vpack.c.b16 %v510, %v502
    %v735 = vpack.c.b16 %v511, %v503
    %v736 = vpack.c.b16 %v512, %v504
    %v737 = vpack.c.b16 %v513, %v505
    %v738 = vpack.c.b16 %v514, %v506
    %v739 = vpack.c.b16 %v515, %v507
    %v740 = vpack.c.b16 %v516, %v508
    %v741 = vpack.c.b16 %v525, %v517
    %v742 = vpack.c.b16 %v526, %v518
    %v743 = vpack.c.b16 %v527, %v519
    %v744 = vpack.c.b16 %v528, %v520
    %v745 = vpack.c.b16 %v529, %v521
    %v746 = vpack.c.b16 %v530, %v522
    %v747 = vpack.c.b16 %v531, %v523
    %v748 = vpack.c.b16 %v532, %v524
    %v749 = vpack.c.b16 %v541, %v533
    %v750 = vpack.c.b16 %v542, %v534
    %v751 = vpack.c.b16 %v543, %v535
    %v752 = vpack.c.b16 %v544, %v536
    %v753 = vpack.c.b16 %v545, %v537
    %v754 = vpack.c.b16 %v546, %v538
    %v755 = vpack.c.b16 %v547, %v539
    %v756 = vpack.c.b16 %v548, %v540
    %v757 = vpack.c.b16 %v557, %v549
    %v758 = vpack.c.b16 %v558, %v550
    %v759 = vpack.c.b16 %v559, %v551
    %v760 = vpack.c.b16 %v560, %v552
    %v761 = vpack.c.b16 %v561, %v553
    %v762 = vpack.c.b16 %v562, %v554
    %v763 = vpack.c.b16 %v563, %v555
    %v764 = vpack.c.b16 %v564, %v556
    %v765 = vpack.c.b16 %v573, %v565
    %v766 = vpack.c.b16 %v574, %v566
    %v767 = vpack.c.b16 %v575, %v567
    %v768 = vpack.c.b16 %v576, %v568
    %v769 = vpack.c.b16 %v577, %v569
    %v770 = vpack.c.b16 %v578, %v570
    %v771 = vpack.c.b16 %v579, %v571
    %v772 = vpack.c.b16 %v580, %v572
    %v773 = vpack.c.b16 %v589, %v581
    %v774 = vpack.c.b16 %v590, %v582
    %v775 = vpack.c.b16 %v591, %v583
    %v776 = vpack.c.b16 %v592, %v584
    %v777 = vpack.c.b16 %v593, %v585
    %v778 = vpack.c.b16 %v594, %v586
    %v779 = vpack.c.b16 %v595, %v587
    %v780 = vpack.c.b16 %v596, %v588
    %v781 = vpack.c.b16 %v605, %v597
    %v782 = vpack.c.b16 %v606, %v598
    %v783 = vpack.c.b16 %v607, %v599
    %v784 = vpack.c.b16 %v608, %v600
    %v785 = vpack.c.b16 %v609, %v601
    %v786 = vpack.c.b16 %v610, %v602
    %v787 = vpack.c.b16 %v611, %v603
    %v788 = vpack.c.b16 %v612, %v604
    %v789 = vpack.c.b16 %v621, %v613
    %v790 = vpack.c.b16 %v622, %v614
    %v791 = vpack.c.b16 %v623, %v615
    %v792 = vpack.c.b16 %v624, %v616
    %v793 = vpack.c.b16 %v625, %v617
    %v794 = vpack.c.b16 %v626, %v618
    %v795 = vpack.c.b16 %v627, %v619
    %v796 = vpack.c.b16 %v628, %v620
    %v797 = vpack.c.b16 %v637, %v629
    %v798 = vpack.c.b16 %v638, %v630
    %v799 = vpack.c.b16 %v639, %v631
    %v800 = vpack.c.b16 %v640, %v632
    %v801 = vpack.c.b16 %v641, %v633
    %v802 = vpack.c.b16 %v642, %v634
    %v803 = vpack.c.b16 %v643, %v635
    %v804 = vpack.c.b16 %v644, %v636
    %v805 = vpack.c.b16 %v653, %v645
    %v806 = vpack.c.b16 %v654, %v646
    %v807 = vpack.c.b16 %v655, %v647
    %v808 = vpack.c.b16 %v656, %v648
    %v809 = vpack.c.b16 %v657, %v649
    %v810 = vpack.c.b16 %v658, %v650
    %v811 = vpack.c.b16 %v659, %v651
    %v812 = vpack.c.b16 %v660, %v652
    %v813 = vpack.c.b16 %v669, %v661
    %v814 = vpack.c.b16 %v670, %v662
    %v815 = vpack.c.b16 %v671, %v663
    %v816 = vpack.c.b16 %v672, %v664
    %v817 = vpack.c.b16 %v673, %v665
    %v818 = vpack.c.b16 %v674, %v666
    %v819 = vpack.c.b16 %v675, %v667
    %v820 = vpack.c.b16 %v676, %v668
    %v821 = vpack.c.b16 %v685, %v677
    %v822 = vpack.c.b16 %v686, %v678
    %v823 = vpack.c.b16 %v687, %v679
    %v824 = vpack.c.b16 %v688, %v680
    %v825 = vpack.c.b16 %v689, %v681
    %v826 = vpack.c.b16 %v690, %v682
    %v827 = vpack.c.b16 %v691, %v683
    %v828 = vpack.c.b16 %v692, %v684
    %v829 = vpack.c.b16 %v701, %v693
    %v830 = vpack.c.b16 %v702, %v694
    %v831 = vpack.c.b16 %v703, %v695
    %v832 = vpack.c.b16 %v704, %v696
    %v833 = vpack.c.b16 %v705, %v697
    %v834 = vpack.c.b16 %v706, %v698
    %v835 = vpack.c.b16 %v707, %v699
    %v836 = vpack.c.b16 %v708, %v700
    %965 = vmatprep.subr.bf16.mxu0 %v710
    %966 = vmatpush1.bf16.msra.mxu0 %v709
    %967 = vmatprep.subr.bf16.mxu0 %v718
    %968 = vmatpush1.bf16.msra.mxu0 %v717
    %969 = vmatprep.subr.bf16.mxu0 %v726
    %970 = vmatpush1.bf16.msra.mxu0 %v725
    %971 = vmatprep.subr.bf16.mxu0 %v734
    %972 = vmatpush1.bf16.msra.mxu0 %v733
    %973 = vmatprep.subr.bf16.mxu0 %v742
    %974 = vmatpush1.bf16.msra.mxu0 %v741
    %975 = vmatprep.subr.bf16.mxu0 %v750
    %976 = vmatpush1.bf16.msra.mxu0 %v749
    %977 = vmatprep.subr.bf16.mxu0 %v758
    %978 = vmatpush1.bf16.msra.mxu0 %v757
    %979 = vmatprep.subr.bf16.mxu0 %v766
    %980 = vmatpush1.bf16.msra.mxu0 %v765
    %981 = vmatprep.subr.bf16.mxu0 %v774
    %982 = vmatpush1.bf16.msra.mxu0 %v773
    %983 = vmatprep.subr.bf16.mxu0 %v782
    %984 = vmatpush1.bf16.msra.mxu0 %v781
    %985 = vmatprep.subr.bf16.mxu0 %v790
    %986 = vmatpush1.bf16.msra.mxu0 %v789
    %987 = vmatprep.subr.bf16.mxu0 %v798
    %988 = vmatpush1.bf16.msra.mxu0 %v797
    %989 = vmatprep.subr.bf16.mxu0 %v806
    %990 = vmatpush1.bf16.msra.mxu0 %v805
    %991 = vmatprep.subr.bf16.mxu0 %v814
    %992 = vmatpush1.bf16.msra.mxu0 %v813
    %993 = vmatprep.subr.bf16.mxu0 %v822
    %994 = vmatpush1.bf16.msra.mxu0 %v821
    %995 = vmatprep.subr.bf16.mxu0 %v830
    %996 = vmatpush1.bf16.msra.mxu0 %v829
    %997 = vmatprep.mubr.bf16.mxu0 %v154
    %998 = vmatmul.mubr.bf16.gmra.mrb[0].mxu0 %v153
    %v999 = vpop.f32.mrb[0].mxu0
    %v1000 = vadd.f32 %v288, %v999
    %v1001 = vpop.f32.mrb[0].mxu0
    %v1002 = vadd.f32 %v292, %v1001
    %v1003 = vpop.f32.mrb[0].mxu0
    %v1004 = vadd.f32 %v288, %v1003
    %v1005 = vpop.f32.mrb[0].mxu0
    %v1006 = vadd.f32 %v292, %v1005
    %1007 = vdwg.mxu0
    %1008 = vmatprep.subr.bf16.mxu0 %v712
    %1009 = vmatpush1.bf16.msra.mxu0 %v711
    %1010 = vmatprep.subr.bf16.mxu0 %v720
    %1011 = vmatpush1.bf16.msra.mxu0 %v719
    %1012 = vmatprep.subr.bf16.mxu0 %v728
    %1013 = vmatpush1.bf16.msra.mxu0 %v727
    %1014 = vmatprep.subr.bf16.mxu0 %v736
    %1015 = vmatpush1.bf16.msra.mxu0 %v735
    %1016 = vmatprep.subr.bf16.mxu0 %v744
    %1017 = vmatpush1.bf16.msra.mxu0 %v743
    %1018 = vmatprep.subr.bf16.mxu0 %v752
    %1019 = vmatpush1.bf16.msra.mxu0 %v751
    %1020 = vmatprep.subr.bf16.mxu0 %v760
    %1021 = vmatpush1.bf16.msra.mxu0 %v759
    %1022 = vmatprep.subr.bf16.mxu0 %v768
    %1023 = vmatpush1.bf16.msra.mxu0 %v767
    %1024 = vmatprep.subr.bf16.mxu0 %v776
    %1025 = vmatpush1.bf16.msra.mxu0 %v775
    %1026 = vmatprep.subr.bf16.mxu0 %v784
    %1027 = vmatpush1.bf16.msra.mxu0 %v783
    %1028 = vmatprep.subr.bf16.mxu0 %v792
    %1029 = vmatpush1.bf16.msra.mxu0 %v791
    %1030 = vmatprep.subr.bf16.mxu0 %v800
    %1031 = vmatpush1.bf16.msra.mxu0 %v799
    %1032 = vmatprep.subr.bf16.mxu0 %v808
    %1033 = vmatpush1.bf16.msra.mxu0 %v807
    %1034 = vmatprep.subr.bf16.mxu0 %v816
    %1035 = vmatpush1.bf16.msra.mxu0 %v815
    %1036 = vmatprep.subr.bf16.mxu0 %v824
    %1037 = vmatpush1.bf16.msra.mxu0 %v823
    %1038 = vmatprep.subr.bf16.mxu0 %v832
    %1039 = vmatpush1.bf16.msra.mxu0 %v831
    %1040 = vmatprep.mubr.bf16.mxu0 %v154
    %1041 = vmatmul.mubr.bf16.gmra.mrb[0].mxu0 %v153
    %v1042 = vpop.f32.mrb[0].mxu0
    %v1043 = vadd.f32 %v296, %v1042
    %v1044 = vpop.f32.mrb[0].mxu0
    %v1045 = vadd.f32 %v300, %v1044
    %v1046 = vpop.f32.mrb[0].mxu0
    %v1047 = vadd.f32 %v296, %v1046
    %v1048 = vpop.f32.mrb[0].mxu0
    %v1049 = vadd.f32 %v300, %v1048
    %1050 = vdwg.mxu0
    %1051 = vmatprep.subr.bf16.mxu0 %v714
    %1052 = vmatpush1.bf16.msra.mxu0 %v713
    %1053 = vmatprep.subr.bf16.mxu0 %v722
    %1054 = vmatpush1.bf16.msra.mxu0 %v721
    %1055 = vmatprep.subr.bf16.mxu0 %v730
    %1056 = vmatpush1.bf16.msra.mxu0 %v729
    %1057 = vmatprep.subr.bf16.mxu0 %v738
    %1058 = vmatpush1.bf16.msra.mxu0 %v737
    %1059 = vmatprep.subr.bf16.mxu0 %v746
    %1060 = vmatpush1.bf16.msra.mxu0 %v745
    %1061 = vmatprep.subr.bf16.mxu0 %v754
    %1062 = vmatpush1.bf16.msra.mxu0 %v753
    %1063 = vmatprep.subr.bf16.mxu0 %v762
    %1064 = vmatpush1.bf16.msra.mxu0 %v761
    %1065 = vmatprep.subr.bf16.mxu0 %v770
    %1066 = vmatpush1.bf16.msra.mxu0 %v769
    %1067 = vmatprep.subr.bf16.mxu0 %v778
    %1068 = vmatpush1.bf16.msra.mxu0 %v777
    %1069 = vmatprep.subr.bf16.mxu0 %v786
    %1070 = vmatpush1.bf16.msra.mxu0 %v785
    %1071 = vmatprep.subr.bf16.mxu0 %v794
    %1072 = vmatpush1.bf16.msra.mxu0 %v793
    %1073 = vmatprep.subr.bf16.mxu0 %v802
    %1074 = vmatpush1.bf16.msra.mxu0 %v801
    %1075 = vmatprep.subr.bf16.mxu0 %v810
    %1076 = vmatpush1.bf16.msra.mxu0 %v809
    %1077 = vmatprep.subr.bf16.mxu0 %v818
    %1078 = vmatpush1.bf16.msra.mxu0 %v817
    %1079 = vmatprep.subr.bf16.mxu0 %v826
    %1080 = vmatpush1.bf16.msra.mxu0 %v825
    %1081 = vmatprep.subr.bf16.mxu0 %v834
    %1082 = vmatpush1.bf16.msra.mxu0 %v833
    %1083 = vmatprep.mubr.bf16.mxu0 %v154
    %1084 = vmatmul.mubr.bf16.gmra.mrb[0].mxu0 %v153
    %v1085 = vpop.f32.mrb[0].mxu0
    %v1086 = vadd.f32 %v304, %v1085
    %v1087 = vpop.f32.mrb[0].mxu0
    %v1088 = vadd.f32 %v308, %v1087
    %v1089 = vpop.f32.mrb[0].mxu0
    %v1090 = vadd.f32 %v304, %v1089
    %v1091 = vpop.f32.mrb[0].mxu0
    %v1092 = vadd.f32 %v308, %v1091
    %1093 = vdwg.mxu0
    %1094 = vmatprep.subr.bf16.mxu0 %v716
    %1095 = vmatpush1.bf16.msra.mxu0 %v715
    %1096 = vmatprep.subr.bf16.mxu0 %v724
    %1097 = vmatpush1.bf16.msra.mxu0 %v723
    %1098 = vmatprep.subr.bf16.mxu0 %v732
    %1099 = vmatpush1.bf16.msra.mxu0 %v731
    %1100 = vmatprep.subr.bf16.mxu0 %v740
    %1101 = vmatpush1.bf16.msra.mxu0 %v739
    %1102 = vmatprep.subr.bf16.mxu0 %v748
    %1103 = vmatpush1.bf16.msra.mxu0 %v747
    %1104 = vmatprep.subr.bf16.mxu0 %v756
    %1105 = vmatpush1.bf16.msra.mxu0 %v755
    %1106 = vmatprep.subr.bf16.mxu0 %v764
    %1107 = vmatpush1.bf16.msra.mxu0 %v763
    %1108 = vmatprep.subr.bf16.mxu0 %v772
    %1109 = vmatpush1.bf16.msra.mxu0 %v771
    %1110 = vmatprep.subr.bf16.mxu0 %v780
    %1111 = vmatpush1.bf16.msra.mxu0 %v779
    %1112 = vmatprep.subr.bf16.mxu0 %v788
    %1113 = vmatpush1.bf16.msra.mxu0 %v787
    %1114 = vmatprep.subr.bf16.mxu0 %v796
    %1115 = vmatpush1.bf16.msra.mxu0 %v795
    %1116 = vmatprep.subr.bf16.mxu0 %v804
    %1117 = vmatpush1.bf16.msra.mxu0 %v803
    %1118 = vmatprep.subr.bf16.mxu0 %v812
    %1119 = vmatpush1.bf16.msra.mxu0 %v811
    %1120 = vmatprep.subr.bf16.mxu0 %v820
    %1121 = vmatpush1.bf16.msra.mxu0 %v819
    %1122 = vmatprep.subr.bf16.mxu0 %v828
    %1123 = vmatpush1.bf16.msra.mxu0 %v827
    %1124 = vmatprep.subr.bf16.mxu0 %v836
    %1125 = vmatpush1.bf16.msra.mxu0 %v835
    %1126 = vmatprep.mubr.bf16.mxu0 %v154
    %1127 = vmatmul.mubr.bf16.gmra.mrb[0].mxu0 %v153
    %v1128 = vpop.f32.mrb[0].mxu0
    %v1129 = vadd.f32 %v312, %v1128
    %v1130 = vpop.f32.mrb[0].mxu0
    %v1131 = vadd.f32 %v316, %v1130
    %v1132 = vpop.f32.mrb[0].mxu0
    %v1133 = vadd.f32 %v312, %v1132
    %v1134 = vpop.f32.mrb[0].mxu0
    %v1135 = vadd.f32 %v316, %v1134
    %1136 = vdwg.mxu0
    %v1137 = vtanh.pop %v1000
    %v1138 = vtanh.pop %v1002
    %v1139 = vtanh.pop %v1043
    %v1140 = vtanh.pop %v1045
    %v1141 = vtanh.pop %v1086
    %v1142 = vtanh.pop %v1088
    %v1143 = vtanh.pop %v1129
    %v1144 = vtanh.pop %v1131
    %v1145 = vtanh.pop %v1004
    %v1146 = vtanh.pop %v1006
    %v1147 = vtanh.pop %v1047
    %v1148 = vtanh.pop %v1049
    %v1149 = vtanh.pop %v1090
    %v1150 = vtanh.pop %v1092
    %v1151 = vtanh.pop %v1133
    %v1152 = vtanh.pop %v1135
    %v1153 = vpack.c.bf16 %v1145, %v1137
    %v1154 = vpack.c.bf16 %v1146, %v1138
    %v1155 = vpack.c.bf16 %v1147, %v1139
    %v1156 = vpack.c.bf16 %v1148, %v1140
    %v1157 = vpack.c.bf16 %v1149, %v1141
    %v1158 = vpack.c.bf16 %v1150, %v1142
    %v1159 = vpack.c.bf16 %v1151, %v1143
    %v1160 = vpack.c.bf16 %v1152, %v1144
    %v1169 = vunpack.c.l.b16 %v1153
    %v1170 = vunpack.c.l.b16 %v1154
    %v1171 = vunpack.c.l.b16 %v1155
    %v1172 = vunpack.c.l.b16 %v1156
    %v1173 = vunpack.c.l.b16 %v1157
    %v1174 = vunpack.c.l.b16 %v1158
    %v1175 = vunpack.c.l.b16 %v1159
    %v1176 = vunpack.c.l.b16 %v1160
    %v1177 = vunpack.c.h.b16 %v1153
    %v1178 = vunpack.c.h.b16 %v1154
    %v1179 = vunpack.c.h.b16 %v1155
    %v1180 = vunpack.c.h.b16 %v1156
    %v1181 = vunpack.c.h.b16 %v1157
    %v1182 = vunpack.c.h.b16 %v1158
    %v1183 = vunpack.c.h.b16 %v1159
    %v1184 = vunpack.c.h.b16 %v1160
    %v1185 = vpack.c.b16 %v1170, %v1169
    %v1186 = vpack.c.b16 %v1172, %v1171
    %v1187 = vpack.c.b16 %v1174, %v1173
    %v1188 = vpack.c.b16 %v1176, %v1175
    %v1189 = vpack.c.b16 %v1178, %v1177
    %v1190 = vpack.c.b16 %v1180, %v1179
    %v1191 = vpack.c.b16 %v1182, %v1181
    %v1192 = vpack.c.b16 %v1184, %v1183
    %1201 = vst [vmem:[#allocation8] sm:$0xff] %v1185
    %1202 = vst [vmem:[#allocation8 + $0x8] sm:$0xff] %v1186
    %1203 = vst [vmem:[#allocation8 + $0x10] sm:$0xff] %v1187
    %1204 = vst [vmem:[#allocation8 + $0x18] sm:$0xff] %v1188
    %1205 = vst [vmem:[#allocation8 + $0x20] sm:$0xff] %v1189
    %1206 = vst [vmem:[#allocation8 + $0x28] sm:$0xff] %v1190
    %1207 = vst [vmem:[#allocation8 + $0x30] sm:$0xff] %v1191
    %1208 = vst [vmem:[#allocation8 + $0x38] sm:$0xff] %v1192
    // Predicated region
    $region34: #{tpu_custom_call.1} parent=1 // pred_check
      _
    $region35: #{tpu_custom_call.1} parent=1 // pred_check_branch
      %1210 = sbr.rel (0) target = $region37
    $region36: #{tpu_custom_call.1} parent=1 // pred_region
      %s1212 = ssub.s32 1024, 1024
      %1213 = vsyncadd [#allocation4], %s1212
      %s1214 = sshll.u32 [#allocation8], 4
      %s1215 = int_to_ptr.vmem [resolvable:$true] %s1214
      %1220 = dma.vmem_to_hbm [thread:$0]  %s1215, 1024, %s5, [#allocation4], 512, 512, 32
    $region37: #{tpu_custom_call.1} parent=1 // pred_fallthru
      _
    // Predicated region
    $region38: #{tpu_custom_call.1} parent=1 // pred_check
      _
    $region39: #{tpu_custom_call.1} parent=1 // pred_check_branch
      %1222 = sbr.rel (0) target = $region41
    $region40: #{tpu_custom_call.1} parent=1 // pred_region
      %1223 = dma.done [#allocation4], 1024
    $region41: #{tpu_custom_call.1} parent=1 // pred_fallthru
      _
    %1224 = vsyncpa [#allocation3], 1
    %1225 = vsyncpa [#allocation6], 1
    %1226 = vsyncpa [#allocation4], 1

</llo_original>
